<compile_context>
chip_gen: v7x
topology: tpu7x:2x2x1
jax: 0.10.0
libtpu: 0.0.40
codegen_flags: <defaults>
</compile_context>

<pallas_src>
import jax
import jax.numpy as jnp
from jax import lax
from jax.experimental import pallas as pl
from jax.experimental.pallas import tpu as pltpu


def _mlp_kernel(x_ref, w1_ref, b1_ref, w2_ref, b2_ref, w3_ref, b3_ref, o_ref):
    # x_ref: (TB, D_in) f32 tile in native row-major layout. The batch->lanes
    # transpose is folded into the first contraction below.
    x_bf = x_ref[...].astype(jnp.bfloat16)                      # (TB, D_in)

    # layer1: (H, D_in) . (TB, D_in)^T -> (H, TB); f32 acc; bias + ReLU f32.
    h1 = lax.dot_general(
        w1_ref[...], x_bf,
        dimension_numbers=(((1,), (1,)), ((), ())),
        preferred_element_type=jnp.float32)
    h1 = jnp.maximum(h1 + b1_ref[...], 0.0)

    # layer2: (H2, H) @ (H, TB) -> (H2, TB); f32 acc; bias + ReLU f32.
    h2 = jnp.dot(w2_ref[...], h1.astype(w2_ref.dtype),
                 preferred_element_type=jnp.float32)
    h2 = jnp.maximum(h2 + b2_ref[...], 0.0)

    # output layer (out_features == 1): VPU multiply + sublane reduce instead
    # of an M=1 MXU pass; result is a lane-dense (1, TB) slab.
    out = jnp.sum(h2 * w3_ref[...], axis=0, keepdims=True)
    o_ref[...] = (out + b3_ref[...]).astype(o_ref.dtype)


def deep_neural_network(x, params, *, tile_b=32768):
    """Fused forward pass. x: (B, input_dim) float32. Returns (B, 1) float32."""
    w1, b1, w2, b2, w3, b3 = params          # PyTorch layout: (out, in) / (out,)
    B, d_in = x.shape
    H = w1.shape[0]
    H2 = w2.shape[0]

    # Batch tile: multiple of 128 (lane-dense output). Clamp so (a) tiny
    # batches aren't over-padded and (b) moderate batches get >=2 grid steps
    # so the "parallel" axis actually shards across TensorCores.
    half_b = pl.cdiv(B, 2 * 128) * 128            # ~B/2 rounded up to 128
    tile_b = max(128, min(tile_b, half_b))
    n_blocks = pl.cdiv(B, tile_b)
    b_out = n_blocks * tile_b                     # padded output width (alloc only)

    # Tiny weights: bf16 matmul inputs, f32 biases / output layer.
    w1b = w1.astype(jnp.bfloat16)                 # (H, D_in)
    w2b = w2.astype(jnp.bfloat16)                 # (H2, H)
    w3c = w3.reshape(H2, 1).astype(jnp.float32)   # (H2, 1)
    b1c = b1.reshape(H, 1).astype(jnp.float32)    # (H, 1)
    b2c = b2.reshape(H2, 1).astype(jnp.float32)   # (H2, 1)
    b3c = b3.reshape(1, 1).astype(jnp.float32)    # (1, 1)

    cost = pl.CostEstimate(
        flops=2 * B * (d_in * H + H * H2 + H2),
        transcendentals=0,
        bytes_accessed=B * d_in * 4 + B * 4
                       + (H * d_in + H2 * H) * 2 + (H + H2 + H2 + 1) * 4,
    )

    out = pl.pallas_call(
        _mlp_kernel,
        out_shape=jax.ShapeDtypeStruct((1, b_out), jnp.float32),
        grid=(n_blocks,),
        in_specs=[
            pl.BlockSpec((tile_b, d_in), lambda i: (i, 0)),   # x: streamed, native layout
            pl.BlockSpec((H, d_in), lambda i: (0, 0)),        # VMEM-resident weights
            pl.BlockSpec((H, 1), lambda i: (0, 0)),
            pl.BlockSpec((H2, H), lambda i: (0, 0)),
            pl.BlockSpec((H2, 1), lambda i: (0, 0)),
            pl.BlockSpec((H2, 1), lambda i: (0, 0)),
            pl.BlockSpec((1, 1), lambda i: (0, 0)),
        ],
        out_specs=pl.BlockSpec((1, tile_b), lambda i: (0, i)),  # lane-dense slab
        compiler_params=pltpu.CompilerParams(
            dimension_semantics=("parallel",),
            vmem_limit_bytes=64 * 1024 * 1024,
        ),
        cost_estimate=cost,
    )(x.astype(jnp.float32), w1b, b1c, w2b, b2c, w3c, b3c)

    return out[0, :B].reshape(B, 1)


def init_params(key, input_dim, hidden_dim):
    """Deterministic synthetic init matching nn.Linear shapes (PyTorch layout)."""
    h2 = hidden_dim // 2
    ks = jax.random.split(key, 6)

    def uniform(k, shape, fan_in):
        bound = 1.0 / jnp.sqrt(jnp.float32(fan_in))
        return jax.random.uniform(k, shape, jnp.float32, -bound, bound)

    w1 = uniform(ks[0], (hidden_dim, input_dim), input_dim)
    b1 = uniform(ks[1], (hidden_dim,), input_dim)
    w2 = uniform(ks[2], (h2, hidden_dim), hidden_dim)
    b2 = uniform(ks[3], (h2,), hidden_dim)
    w3 = uniform(ks[4], (1, h2), h2)
    b3 = uniform(ks[5], (1,), h2)
    return (w1, b1, w2, b2, w3, b3)


def _reference_bf16(x, params):
    """Pure-JAX reference applying the same bf16 roundings the kernel uses
    (x, W1, W2 and the layer-1 activation); biases / output layer stay f32."""
    w1, b1, w2, b2, w3, b3 = params

    def bf(a):
        return a.astype(jnp.bfloat16).astype(jnp.float32)

    h = jnp.maximum(bf(x) @ bf(w1).T + b1, 0.0)
    h = jnp.maximum(bf(h) @ bf(w2).T + b2, 0.0)
    return h @ w3.T + b3


if __name__ == "__main__":
    key = jax.random.PRNGKey(0)
    batch, input_dim, hidden_dim = 8, 16, 32

    kx, kp = jax.random.split(key)
    x = jax.random.normal(kx, (batch, input_dim), jnp.float32)
    params = init_params(kp, input_dim, hidden_dim)

    out = jax.block_until_ready(deep_neural_network(x, params))
    assert out.shape == (batch, 1)

    ref = _reference_bf16(x, params)
    assert jnp.allclose(out, ref, atol=2e-2, rtol=2e-2), (out, ref)
    print("KERNEL_OK")
</pallas_src>

<mosaic_0001>
module attributes {stable_mosaic.version = 11 : i64} {
  func.func @_mlp_kernel(%arg0: i32, %arg1: memref<128x16xf32, #tpu.memory_space<vmem>>, %arg2: memref<32x16xbf16, #tpu.memory_space<vmem>>, %arg3: memref<32x1xf32, #tpu.memory_space<vmem>>, %arg4: memref<16x32xbf16, #tpu.memory_space<vmem>>, %arg5: memref<16x1xf32, #tpu.memory_space<vmem>>, %arg6: memref<16x1xf32, #tpu.memory_space<vmem>>, %arg7: memref<1x1xf32, #tpu.memory_space<vmem>>, %arg8: memref<1x128xf32, #tpu.memory_space<vmem>>) attributes {dimension_semantics = [#tpu.dimension_semantics<parallel>], iteration_bounds = array<i64: 1>, scalar_prefetch = 0 : i64, scratch_operands = 0 : i64, tpu.core_type = #tpu.core_type<tc>, window_params = [{transform_indices = @transform_0, window_bounds = array<i64: 128, 16>}, {pipeline_mode = #tpu.pipeline_mode<synchronous>, transform_indices = @transform_1, window_bounds = array<i64: 32, 16>}, {pipeline_mode = #tpu.pipeline_mode<synchronous>, transform_indices = @transform_2, window_bounds = array<i64: 32, 1>}, {pipeline_mode = #tpu.pipeline_mode<synchronous>, transform_indices = @transform_3, window_bounds = array<i64: 16, 32>}, {pipeline_mode = #tpu.pipeline_mode<synchronous>, transform_indices = @transform_4, window_bounds = array<i64: 16, 1>}, {pipeline_mode = #tpu.pipeline_mode<synchronous>, transform_indices = @transform_5, window_bounds = array<i64: 16, 1>}, {pipeline_mode = #tpu.pipeline_mode<synchronous>, transform_indices = @transform_6, window_bounds = array<i64: 1, 1>}, {transform_indices = @transform_7, window_bounds = array<i64: 1, 128>}]} {
    %c0 = arith.constant 0 : index
    %c0_0 = arith.constant 0 : index
    %0 = vector.load %arg1[%c0, %c0_0] : memref<128x16xf32, #tpu.memory_space<vmem>>, vector<128x16xf32>
    %1 = arith.truncf %0 : vector<128x16xf32> to vector<128x16xbf16>
    %c0_1 = arith.constant 0 : index
    %c0_2 = arith.constant 0 : index
    %2 = vector.load %arg2[%c0_1, %c0_2] : memref<32x16xbf16, #tpu.memory_space<vmem>>, vector<32x16xbf16>
    %cst = arith.constant dense<0.000000e+00> : vector<32x128xf32>
    %3 = tpu.matmul %2, %1, %cst {dimension_numbers = #tpu.dot_dimension_numbers<[1], [1], [0], [0], [0, 0, 1, 0], [], []>} : vector<32x16xbf16>, vector<128x16xbf16>, vector<32x128xf32> -> vector<32x128xf32>
    %c0_3 = arith.constant 0 : index
    %c0_4 = arith.constant 0 : index
    %4 = vector.load %arg3[%c0_3, %c0_4] : memref<32x1xf32, #tpu.memory_space<vmem>>, vector<32x1xf32>
    %5 = vector.broadcast %4 : vector<32x1xf32> to vector<32x128xf32>
    %6 = arith.addf %3, %5 : vector<32x128xf32>
    %cst_5 = arith.constant 0.000000e+00 : f32
    %7 = vector.broadcast %cst_5 : f32 to vector<32x128xf32>
    %8 = arith.maximumf %6, %7 : vector<32x128xf32>
    %c0_6 = arith.constant 0 : index
    %c0_7 = arith.constant 0 : index
    %9 = vector.load %arg4[%c0_6, %c0_7] : memref<16x32xbf16, #tpu.memory_space<vmem>>, vector<16x32xbf16>
    %10 = arith.truncf %8 : vector<32x128xf32> to vector<32x128xbf16>
    %cst_8 = arith.constant dense<0.000000e+00> : vector<16x128xf32>
    %11 = tpu.matmul %9, %10, %cst_8 {dimension_numbers = #tpu.dot_dimension_numbers<[1], [0], [0], [1], [0, 0, 1, 1], [], []>} : vector<16x32xbf16>, vector<32x128xbf16>, vector<16x128xf32> -> vector<16x128xf32>
    %c0_9 = arith.constant 0 : index
    %c0_10 = arith.constant 0 : index
    %12 = vector.load %arg5[%c0_9, %c0_10] : memref<16x1xf32, #tpu.memory_space<vmem>>, vector<16x1xf32>
    %13 = vector.broadcast %12 : vector<16x1xf32> to vector<16x128xf32>
    %14 = arith.addf %11, %13 : vector<16x128xf32>
    %cst_11 = arith.constant 0.000000e+00 : f32
    %15 = vector.broadcast %cst_11 : f32 to vector<16x128xf32>
    %16 = arith.maximumf %14, %15 : vector<16x128xf32>
    %c0_12 = arith.constant 0 : index
    %c0_13 = arith.constant 0 : index
    %17 = vector.load %arg6[%c0_12, %c0_13] : memref<16x1xf32, #tpu.memory_space<vmem>>, vector<16x1xf32>
    %18 = vector.broadcast %17 : vector<16x1xf32> to vector<16x128xf32>
    %19 = arith.mulf %16, %18 : vector<16x128xf32>
    %cst_14 = arith.constant dense<0.000000e+00> : vector<128xf32>
    %20 = vector.multi_reduction <add>, %19, %cst_14 [0] : vector<16x128xf32> to vector<128xf32>
    %21 = vector.shape_cast %20 : vector<128xf32> to vector<1x128xf32>
    %c0_15 = arith.constant 0 : index
    %c0_16 = arith.constant 0 : index
    %22 = vector.load %arg7[%c0_15, %c0_16] : memref<1x1xf32, #tpu.memory_space<vmem>>, vector<1x1xf32>
    %23 = vector.broadcast %22 : vector<1x1xf32> to vector<1x128xf32>
    %24 = arith.addf %21, %23 : vector<1x128xf32>
    %c0_17 = arith.constant 0 : index
    %c0_18 = arith.constant 0 : index
    %25 = vector.load %arg8[%c0_17, %c0_18] : memref<1x128xf32, #tpu.memory_space<vmem>>, vector<1x128xf32>
    tpu.vector_store %arg8[%c0_17, %c0_18], %24 {strides = array<i32>} : memref<1x128xf32, #tpu.memory_space<vmem>>, vector<1x128xf32>,
    return
  }
  func.func @transform_0(%arg0: i32) -> (i32, i32) {
    %c0_i32 = arith.constant 0 : i32
    %c0_i32_0 = arith.constant 0 : i32
    return %arg0, %c0_i32 : i32, i32
  }
  func.func @transform_1(%arg0: i32) -> (i32, i32) {
    %c0_i32 = arith.constant 0 : i32
    %c0_i32_0 = arith.constant 0 : i32
    %c0_i32_1 = arith.constant 0 : i32
    return %c0_i32, %c0_i32_0 : i32, i32
  }
  func.func @transform_2(%arg0: i32) -> (i32, i32) {
    %c0_i32 = arith.constant 0 : i32
    %c0_i32_0 = arith.constant 0 : i32
    %c0_i32_1 = arith.constant 0 : i32
    return %c0_i32, %c0_i32_0 : i32, i32
  }
  func.func @transform_3(%arg0: i32) -> (i32, i32) {
    %c0_i32 = arith.constant 0 : i32
    %c0_i32_0 = arith.constant 0 : i32
    %c0_i32_1 = arith.constant 0 : i32
    return %c0_i32, %c0_i32_0 : i32, i32
  }
  func.func @transform_4(%arg0: i32) -> (i32, i32) {
    %c0_i32 = arith.constant 0 : i32
    %c0_i32_0 = arith.constant 0 : i32
    %c0_i32_1 = arith.constant 0 : i32
    return %c0_i32, %c0_i32_0 : i32, i32
  }
  func.func @transform_5(%arg0: i32) -> (i32, i32) {
    %c0_i32 = arith.constant 0 : i32
    %c0_i32_0 = arith.constant 0 : i32
    %c0_i32_1 = arith.constant 0 : i32
    return %c0_i32, %c0_i32_0 : i32, i32
  }
  func.func @transform_6(%arg0: i32) -> (i32, i32) {
    %c0_i32 = arith.constant 0 : i32
    %c0_i32_0 = arith.constant 0 : i32
    %c0_i32_1 = arith.constant 0 : i32
    return %c0_i32, %c0_i32_0 : i32, i32
  }
  func.func @transform_7(%arg0: i32) -> (i32, i32) {
    %c0_i32 = arith.constant 0 : i32
    %c0_i32_0 = arith.constant 0 : i32
    return %c0_i32, %arg0 : i32, i32
  }
}

</mosaic_0001>

<llo_original>
// kernel: tpu_custom_call.1
$region0: #{tpu_custom_call.1}
  #allocation0 [shape = 'u32[]', space=smem, size = 0x4, offset = 0x4, fixed_abs, tag = 'smem constant byte address 0x4 - core index']
  #allocation1 [shape = 'u32[144,128]{1,0:T(1,128)}', space=vmem, size = 0x12000, scoped, tag = 'internal scratch']
  #allocation2 [shape = 'f32[1,1]{1,0:T(1,128)S(1)}', space=vmem, size = 0x200, scoped, tag = 'scoped memory for tpu_custom_call.1']
  %s0 = inlined_call_operand.hbm [shape: f32[8,16], index: 0, kind: input, shape index: {}]
  %s1 = inlined_call_operand.hbm [shape: bf16[32,16], index: 1, kind: input, shape index: {}]
  %s2 = inlined_call_operand.hbm [shape: f32[32,1], index: 2, kind: input, shape index: {}]
  %s3 = inlined_call_operand.hbm [shape: bf16[16,32], index: 3, kind: input, shape index: {}]
  %s4 = inlined_call_operand.hbm [shape: f32[16,1], index: 4, kind: input, shape index: {}]
  %s5 = inlined_call_operand.hbm [shape: f32[16,1], index: 5, kind: input, shape index: {}]
  %s6 = inlined_call_operand.<no memory space> [shape: f32[1,1], index: 6, kind: input, shape index: {}]
  %s7 = inlined_call_operand.hbm [shape: f32[1,128], index: 7, kind: output, shape index: {}]
  %s8 = sld [smem:[#allocation0]]
  $region62: #{tpu_custom_call.1} parent=0
    _
  %s10 = ssub.s32 1, %s8
  %s11 = scalar_select 0, %s10, %s8
  %v12 = vstv %s6
  %13 = vst [vmem:[#allocation2] sm:$0x1] %v12
  $region1: #{tpu_custom_call.1} parent=0
    #allocation3 [shape = 'u8[65536]{0}', space=vmem, size = 0x10000, scoped, tag = 'input window, operand 0, single buffered']
    #allocation4 [shape = 's32[1]{0}', space=sflag, size = 0x4, scoped, tag = 'scoped memory for tpu_custom_call.1']
    #allocation5 [shape = 's32[1]{0}', space=sflag, size = 0x4, scoped, tag = 'scoped memory for tpu_custom_call.1']
    #allocation6 [shape = 'u8[8192]{0}', space=vmem, size = 0x2000, scoped, tag = 'input window, operand 1, single buffered']
    #allocation7 [shape = 's32[1]{0}', space=sflag, size = 0x4, scoped, tag = 'scoped memory for tpu_custom_call.1']
    #allocation8 [shape = 'u8[16384]{0}', space=vmem, size = 0x4000, scoped, tag = 'input window, operand 2, single buffered']
    #allocation9 [shape = 'u8[4096]{0}', space=vmem, size = 0x1000, scoped, tag = 'input window, operand 3, single buffered']
    #allocation10 [shape = 's32[1]{0}', space=sflag, size = 0x4, scoped, tag = 'scoped memory for tpu_custom_call.1']
    #allocation11 [shape = 'u8[8192]{0}', space=vmem, size = 0x2000, scoped, tag = 'input window, operand 4, single buffered']
    #allocation12 [shape = 'u8[8192]{0}', space=vmem, size = 0x2000, scoped, tag = 'input window, operand 5, single buffered']
    #allocation13 [shape = 's32[1]{0}', space=sflag, size = 0x4, scoped, tag = 'scoped memory for tpu_custom_call.1']
    #allocation14 [shape = 'u8[512]{0}', space=vmem, size = 0x400, scoped, tag = 'output window, operand 0, single buffered']
    %14 = vsyncpa [#allocation4], 0
    %15 = vsyncpa [#allocation7], 0
    %16 = vsyncpa [#allocation10], 0
    %17 = vsyncpa [#allocation13], 0
    %18 = vsyncpa [#allocation5], 0
    // Predicated region
    $region2: #{tpu_custom_call.1} parent=1 // pred_check
      _
    $region3: #{tpu_custom_call.1} parent=1 // pred_check_branch
      %20 = sbr.rel (0) target = $region5
    $region4: #{tpu_custom_call.1} parent=1 // pred_region
      %s22 = ssub.s32 2048, 128
      %23 = vsyncadd [#allocation4], %s22
      %s24 = sshll.u32 [#allocation3], 4
      %s25 = int_to_ptr.vmem [resolvable:$true] %s24
      %30 = dma.hbm_to_vmem [thread:$0]  %s0, 128, %s25, [#allocation4], 128, 128, 8
    $region5: #{tpu_custom_call.1} parent=1 // pred_fallthru
      _
    // Predicated region
    $region6: #{tpu_custom_call.1} parent=1 // pred_check
      _
    $region7: #{tpu_custom_call.1} parent=1 // pred_check_branch
      %32 = sbr.rel (0) target = $region9
    $region8: #{tpu_custom_call.1} parent=1 // pred_region
      %s34 = ssub.s32 256, 256
      %35 = vsyncadd [#allocation7], %s34
      %s36 = sshll.u32 [#allocation6], 4
      %s37 = int_to_ptr.vmem [resolvable:$true] %s36
      %42 = dma.hbm_to_vmem [thread:$0]  %s1, 256, %s37, [#allocation7], 64, 64, 4
    $region9: #{tpu_custom_call.1} parent=1 // pred_fallthru
      _
    // Predicated region
    $region10: #{tpu_custom_call.1} parent=1 // pred_check
      _
    $region11: #{tpu_custom_call.1} parent=1 // pred_check_branch
      %44 = sbr.rel (0) target = $region13
    $region12: #{tpu_custom_call.1} parent=1 // pred_region
      %s46 = ssub.s32 512, 512
      %47 = vsyncadd [#allocation7], %s46
      %s48 = sshll.u32 [#allocation8], 4
      %s49 = int_to_ptr.vmem [resolvable:$true] %s48
      %54 = dma.hbm_to_vmem [thread:$0]  %s2, 512, %s49, [#allocation7], 128, 128, 8
    $region13: #{tpu_custom_call.1} parent=1 // pred_fallthru
      _
    // Predicated region
    $region14: #{tpu_custom_call.1} parent=1 // pred_check
      _
    $region15: #{tpu_custom_call.1} parent=1 // pred_check_branch
      %56 = sbr.rel (0) target = $region17
    $region16: #{tpu_custom_call.1} parent=1 // pred_region
      %s58 = ssub.s32 128, 128
      %59 = vsyncadd [#allocation10], %s58
      %s60 = sshll.u32 [#allocation9], 4
      %s61 = int_to_ptr.vmem [resolvable:$true] %s60
      %66 = dma.hbm_to_vmem [thread:$0]  %s3, 128, %s61, [#allocation10], 64, 64, 4
    $region17: #{tpu_custom_call.1} parent=1 // pred_fallthru
      _
    // Predicated region
    $region18: #{tpu_custom_call.1} parent=1 // pred_check
      _
    $region19: #{tpu_custom_call.1} parent=1 // pred_check_branch
      %68 = sbr.rel (0) target = $region21
    $region20: #{tpu_custom_call.1} parent=1 // pred_region
      %s70 = ssub.s32 256, 256
      %71 = vsyncadd [#allocation10], %s70
      %s72 = sshll.u32 [#allocation11], 4
      %s73 = int_to_ptr.vmem [resolvable:$true] %s72
      %78 = dma.hbm_to_vmem [thread:$0]  %s4, 256, %s73, [#allocation10], 128, 128, 8
    $region21: #{tpu_custom_call.1} parent=1 // pred_fallthru
      _
    // Predicated region
    $region22: #{tpu_custom_call.1} parent=1 // pred_check
      _
    $region23: #{tpu_custom_call.1} parent=1 // pred_check_branch
      %80 = sbr.rel (0) target = $region25
    $region24: #{tpu_custom_call.1} parent=1 // pred_region
      %s82 = ssub.s32 256, 256
      %83 = vsyncadd [#allocation13], %s82
      %s84 = sshll.u32 [#allocation12], 4
      %s85 = int_to_ptr.vmem [resolvable:$true] %s84
      %90 = dma.hbm_to_vmem [thread:$0]  %s5, 256, %s85, [#allocation13], 128, 128, 8
    $region25: #{tpu_custom_call.1} parent=1 // pred_fallthru
      _
    // Predicated region
    $region26: #{tpu_custom_call.1} parent=1 // pred_check
      _
    $region27: #{tpu_custom_call.1} parent=1 // pred_check_branch
      %92 = sbr.rel (0) target = $region29
    $region28: #{tpu_custom_call.1} parent=1 // pred_region
      _
    $region29: #{tpu_custom_call.1} parent=1 // pred_fallthru
      _
    // Predicated region
    $region30: #{tpu_custom_call.1} parent=1 // pred_check
      _
    $region31: #{tpu_custom_call.1} parent=1 // pred_check_branch
      %94 = sbr.rel (0) target = $region33
    $region32: #{tpu_custom_call.1} parent=1 // pred_region
      %95 = dma.done [#allocation4], 2048
    $region33: #{tpu_custom_call.1} parent=1 // pred_fallthru
      _
    // Predicated region
    $region34: #{tpu_custom_call.1} parent=1 // pred_check
      _
    $region35: #{tpu_custom_call.1} parent=1 // pred_check_branch
      %97 = sbr.rel (0) target = $region37
    $region36: #{tpu_custom_call.1} parent=1 // pred_region
      %98 = dma.done [#allocation7], 256
    $region37: #{tpu_custom_call.1} parent=1 // pred_fallthru
      _
    // Predicated region
    $region38: #{tpu_custom_call.1} parent=1 // pred_check
      _
    $region39: #{tpu_custom_call.1} parent=1 // pred_check_branch
      %100 = sbr.rel (0) target = $region41
    $region40: #{tpu_custom_call.1} parent=1 // pred_region
      %101 = dma.done [#allocation7], 512
    $region41: #{tpu_custom_call.1} parent=1 // pred_fallthru
      _
    // Predicated region
    $region42: #{tpu_custom_call.1} parent=1 // pred_check
      _
    $region43: #{tpu_custom_call.1} parent=1 // pred_check_branch
      %103 = sbr.rel (0) target = $region45
    $region44: #{tpu_custom_call.1} parent=1 // pred_region
      %104 = dma.done [#allocation10], 128
    $region45: #{tpu_custom_call.1} parent=1 // pred_fallthru
      _
    // Predicated region
    $region46: #{tpu_custom_call.1} parent=1 // pred_check
      _
    $region47: #{tpu_custom_call.1} parent=1 // pred_check_branch
      %106 = sbr.rel (0) target = $region49
    $region48: #{tpu_custom_call.1} parent=1 // pred_region
      %107 = dma.done [#allocation10], 256
    $region49: #{tpu_custom_call.1} parent=1 // pred_fallthru
      _
    // Predicated region
    $region50: #{tpu_custom_call.1} parent=1 // pred_check
      _
    $region51: #{tpu_custom_call.1} parent=1 // pred_check_branch
      %109 = sbr.rel (0) target = $region53
    $region52: #{tpu_custom_call.1} parent=1 // pred_region
      %110 = dma.done [#allocation13], 256
    $region53: #{tpu_custom_call.1} parent=1 // pred_fallthru
      _
    %v112 = vld [vmem:[#allocation3] sm:$0xff]
    %v113 = vld [vmem:[#allocation3 + $0x8] sm:$0xff]
    %v114 = vld [vmem:[#allocation3 + $0x10] sm:$0xff]
    %v115 = vld [vmem:[#allocation3 + $0x18] sm:$0xff]
    %v116 = vld [vmem:[#allocation3 + $0x20] sm:$0xff]
    %v117 = vld [vmem:[#allocation3 + $0x28] sm:$0xff]
    %v118 = vld [vmem:[#allocation3 + $0x30] sm:$0xff]
    %v119 = vld [vmem:[#allocation3 + $0x38] sm:$0xff]
    %v120 = vld [vmem:[#allocation3 + $0x40] sm:$0xff]
    %v121 = vld [vmem:[#allocation3 + $0x48] sm:$0xff]
    %v122 = vld [vmem:[#allocation3 + $0x50] sm:$0xff]
    %v123 = vld [vmem:[#allocation3 + $0x58] sm:$0xff]
    %v124 = vld [vmem:[#allocation3 + $0x60] sm:$0xff]
    %v125 = vld [vmem:[#allocation3 + $0x68] sm:$0xff]
    %v126 = vld [vmem:[#allocation3 + $0x70] sm:$0xff]
    %v127 = vld [vmem:[#allocation3 + $0x78] sm:$0xff]
    %v128 = vpack.c.bf16 %v113, %v112
    %v129 = vpack.c.bf16 %v115, %v114
    %v130 = vpack.c.bf16 %v117, %v116
    %v131 = vpack.c.bf16 %v119, %v118
    %v132 = vpack.c.bf16 %v121, %v120
    %v133 = vpack.c.bf16 %v123, %v122
    %v134 = vpack.c.bf16 %v125, %v124
    %v135 = vpack.c.bf16 %v127, %v126
    %v136 = vld [vmem:[#allocation6] sm:$0xf]
    %v137 = vld [vmem:[#allocation6 + $0x4] sm:$0xf]
    %v138 = vld [vmem:[#allocation6 + $0x8] sm:$0xf]
    %v139 = vld [vmem:[#allocation6 + $0xc] sm:$0xf]
    %v140 = vld [vmem:[#allocation8] sm:$0xff]
    %v141 = vld [vmem:[#allocation8 + $0x8] sm:$0xff]
    %v142 = vld [vmem:[#allocation8 + $0x10] sm:$0xff]
    %v143 = vld [vmem:[#allocation8 + $0x18] sm:$0xff]
    %145 = vset.pattern.permute.xlu0 0
    %146 = vperm.xlu0 %145, %v140
    %v147 = vpop.permute.xlu0 %146
    %150 = vset.pattern.permute.xlu0 0
    %151 = vperm.xlu0 %150, %v141
    %v152 = vpop.permute.xlu0 %151
    %155 = vset.pattern.permute.xlu0 0
    %156 = vperm.xlu0 %155, %v142
    %v157 = vpop.permute.xlu0 %156
    %160 = vset.pattern.permute.xlu0 0
    %161 = vperm.xlu0 %160, %v143
    %v162 = vpop.permute.xlu0 %161
    %v168 = vunpack.c.l.b16 %v136
    %v169 = vunpack.c.l.b16 %v137
    %v170 = vunpack.c.l.b16 %v138
    %v171 = vunpack.c.l.b16 %v139
    %v172 = vpack.c.b16 %v169, %v168
    %v173 = vpack.c.b16 %v171, %v170
    %vm174 = vcmask 130048
    %v176 = vsel %vm174, %v172, 0
    %v179 = vsel %vm174, %v173, 0
    %v182 = vsel %vm174, %v128, 0
    %v185 = vsel %vm174, %v129, 0
    %v188 = vsel %vm174, %v130, 0
    %v191 = vsel %vm174, %v131, 0
    %v194 = vsel %vm174, %v132, 0
    %v197 = vsel %vm174, %v133, 0
    %v200 = vsel %vm174, %v134, 0
    %v203 = vsel %vm174, %v135, 0
    %205 = vmatprep.subr.bf16.mxu0 0
    %206 = vmatpush1.bf16.xpose.msra.mxu0 %v182
    %207 = vmatprep.subr.bf16.mxu0 0
    %208 = vmatpush1.bf16.xpose.msra.mxu0 %v185
    %209 = vmatprep.subr.bf16.mxu0 0
    %210 = vmatpush1.bf16.xpose.msra.mxu0 %v188
    %211 = vmatprep.subr.bf16.mxu0 0
    %212 = vmatpush1.bf16.xpose.msra.mxu0 %v191
    %213 = vmatprep.subr.bf16.mxu0 0
    %214 = vmatpush1.bf16.xpose.msra.mxu0 %v194
    %215 = vmatprep.subr.bf16.mxu0 0
    %216 = vmatpush1.bf16.xpose.msra.mxu0 %v197
    %217 = vmatprep.subr.bf16.mxu0 0
    %218 = vmatpush1.bf16.xpose.msra.mxu0 %v200
    %219 = vmatprep.subr.bf16.mxu0 0
    %220 = vmatpush1.bf16.xpose.msra.mxu0 %v203
    %221 = vmatprep.subr.bf16.mxu0 0
    %222 = vmatpush1.bf16.xpose.msra.mxu0 0
    %223 = vmatprep.subr.bf16.mxu0 0
    %224 = vmatpush1.bf16.xpose.msra.mxu0 0
    %225 = vmatprep.subr.bf16.mxu0 0
    %226 = vmatpush1.bf16.xpose.msra.mxu0 0
    %227 = vmatprep.subr.bf16.mxu0 0
    %228 = vmatpush1.bf16.xpose.msra.mxu0 0
    %229 = vmatprep.subr.bf16.mxu0 0
    %230 = vmatpush1.bf16.xpose.msra.mxu0 0
    %231 = vmatprep.subr.bf16.mxu0 0
    %232 = vmatpush1.bf16.xpose.msra.mxu0 0
    %233 = vmatprep.subr.bf16.mxu0 0
    %234 = vmatpush1.bf16.xpose.msra.mxu0 0
    %235 = vmatprep.subr.bf16.mxu0 0
    %236 = vmatpush1.bf16.xpose.msra.mxu0 0
    %237 = vmatprep.mubr.bf16.mxu0 0
    %238 = vmatmul.mubr.bf16.gmra.mrb[0].mxu0 %v176
    %v239 = vpop.f32.mrb[0].mxu0
    %v240 = vadd.f32 %v147, %v239
    %v241 = vpop.f32.mrb[0].mxu0
    %v242 = vpop.f32.mrb[0].mxu0
    %v243 = vadd.f32 %v152, %v242
    %v244 = vpop.f32.mrb[0].mxu0
    %245 = vmatprep.mubr.bf16.mxu0 0
    %246 = vmatmul.mubr.bf16.gmra.mrb[0].mxu0 %v179
    %v247 = vpop.f32.mrb[0].mxu0
    %v248 = vadd.f32 %v157, %v247
    %v249 = vpop.f32.mrb[0].mxu0
    %v250 = vpop.f32.mrb[0].mxu0
    %v251 = vadd.f32 %v162, %v250
    %v252 = vpop.f32.mrb[0].mxu0
    %253 = vdwg.mxu0
    %v254 = vmax.f32 %v240, 0.0
    %v255 = vmax.f32 %v243, 0.0
    %v256 = vmax.f32 %v248, 0.0
    %v257 = vmax.f32 %v251, 0.0
    %v258 = vld [vmem:[#allocation9] sm:$0xf]
    %v259 = vld [vmem:[#allocation9 + $0x4] sm:$0xf]
    %v260 = vpack.c.bf16 %v255, %v254
    %v261 = vpack.c.bf16 %v257, %v256
    %v262 = vld [vmem:[#allocation11] sm:$0xff]
    %v263 = vld [vmem:[#allocation11 + $0x8] sm:$0xff]
    %265 = vset.pattern.permute.xlu0 0
    %266 = vperm.xlu0 %265, %v262
    %v267 = vpop.permute.xlu0 %266
    %270 = vset.pattern.permute.xlu0 0
    %271 = vperm.xlu0 %270, %v263
    %v272 = vpop.permute.xlu0 %271
    %v276 = vunpack.c.l.b16 %v258
    %v277 = vunpack.c.l.b16 %v259
    %v278 = vpack.c.b16 %v277, %v276
    %vm279 = vcmask 261120
    %v281 = vsel %vm279, %v278, 0
    %283 = vmatprep.subr.bf16.mxu0 0
    %284 = vmatpush1.bf16.msra.mxu0 %v260
    %285 = vmatprep.subr.bf16.mxu0 0
    %286 = vmatpush1.bf16.msra.mxu0 %v261
    %287 = vmatprep.subr.bf16.mxu0 0
    %288 = vmatpush1.bf16.msra.mxu0 0
    %289 = vmatprep.subr.bf16.mxu0 0
    %290 = vmatpush1.bf16.msra.mxu0 0
    %291 = vmatprep.subr.bf16.mxu0 0
    %292 = vmatpush1.bf16.msra.mxu0 0
    %293 = vmatprep.subr.bf16.mxu0 0
    %294 = vmatpush1.bf16.msra.mxu0 0
    %295 = vmatprep.subr.bf16.mxu0 0
    %296 = vmatpush1.bf16.msra.mxu0 0
    %297 = vmatprep.subr.bf16.mxu0 0
    %298 = vmatpush1.bf16.msra.mxu0 0
    %299 = vmatprep.subr.bf16.mxu0 0
    %300 = vmatpush1.bf16.msra.mxu0 0
    %301 = vmatprep.subr.bf16.mxu0 0
    %302 = vmatpush1.bf16.msra.mxu0 0
    %303 = vmatprep.subr.bf16.mxu0 0
    %304 = vmatpush1.bf16.msra.mxu0 0
    %305 = vmatprep.subr.bf16.mxu0 0
    %306 = vmatpush1.bf16.msra.mxu0 0
    %307 = vmatprep.subr.bf16.mxu0 0
    %308 = vmatpush1.bf16.msra.mxu0 0
    %309 = vmatprep.subr.bf16.mxu0 0
    %310 = vmatpush1.bf16.msra.mxu0 0
    %311 = vmatprep.subr.bf16.mxu0 0
    %312 = vmatpush1.bf16.msra.mxu0 0
    %313 = vmatprep.subr.bf16.mxu0 0
    %314 = vmatpush1.bf16.msra.mxu0 0
    %315 = vmatprep.mubr.bf16.mxu0 0
    %316 = vmatmul.mubr.bf16.gmra.mrb[0].mxu0 %v281
    %v317 = vpop.f32.mrb[0].mxu0
    %v318 = vadd.f32 %v267, %v317
    %v319 = vpop.f32.mrb[0].mxu0
    %v320 = vpop.f32.mrb[0].mxu0
    %v321 = vadd.f32 %v272, %v320
    %v322 = vpop.f32.mrb[0].mxu0
    %323 = vdwg.mxu0
    %v324 = vmax.f32 %v318, 0.0
    %v325 = vmax.f32 %v321, 0.0
    %v326 = vld [vmem:[#allocation12] sm:$0xff]
    %v327 = vld [vmem:[#allocation12 + $0x8] sm:$0xff]
    %329 = vset.pattern.permute.xlu0 0
    %330 = vperm.xlu0 %329, %v326
    %v331 = vpop.permute.xlu0 %330
    %334 = vset.pattern.permute.xlu0 0
    %335 = vperm.xlu0 %334, %v327
    %v336 = vpop.permute.xlu0 %335
    %v338 = vmul.f32 %v324, %v331
    %v339 = vmul.f32 %v325, %v336
    %v340 = vadd.f32 %v338, %v339
    %v341 = vrot.slane %v340, 4
    %v342 = vadd.f32 %v340, %v341
    %v343 = vrot.slane %v342, 2
    %v344 = vadd.f32 %v342, %v343
    %v345 = vrot.slane %v344, 1
    %v346 = vadd.f32 %v344, %v345
    %v347 = vld [vmem:[#allocation2] sm:$0x1]
    %349 = vset.pattern.permute.xlu0 0
    %350 = vperm.xlu0 %349, %v347
    %v351 = vpop.permute.xlu0 %350
    %v353 = vlaneseq
    %v354 = vshrl.u32 %v353, 7
    %v355 = vsub.s32 0, %v354
    %v356 = vrot.slane %v351, %v355
    %v357 = vadd.f32 %v346, %v356
    %358 = vst [vmem:[#allocation14] sm:$0x1] %v357
    // Predicated region
    $region54: #{tpu_custom_call.1} parent=1 // pred_check
      _
    $region55: #{tpu_custom_call.1} parent=1 // pred_check_branch
      %360 = sbr.rel (0) target = $region57
    $region56: #{tpu_custom_call.1} parent=1 // pred_region
      %s362 = ssub.s32 16, 16
      %363 = vsyncadd [#allocation5], %s362
      %s365 = sshll.u32 [#allocation14], 4
      %s366 = int_to_ptr.vmem [resolvable:$true] %s365
      %368 = dma.vmem_to_hbm [thread:$0]  %s366, 16, %s7, [#allocation5]
    $region57: #{tpu_custom_call.1} parent=1 // pred_fallthru
      _
    // Predicated region
    $region58: #{tpu_custom_call.1} parent=1 // pred_check
      _
    $region59: #{tpu_custom_call.1} parent=1 // pred_check_branch
      %370 = sbr.rel (0) target = $region61
    $region60: #{tpu_custom_call.1} parent=1 // pred_region
      %371 = dma.done [#allocation5], 16
    $region61: #{tpu_custom_call.1} parent=1 // pred_fallthru
      _
    %372 = vsyncpa [#allocation4], 1
    %373 = vsyncpa [#allocation7], 1
    %374 = vsyncpa [#allocation10], 1
    %375 = vsyncpa [#allocation13], 1
    %376 = vsyncpa [#allocation5], 1

</llo_original>
